<compile_context>
chip_gen: v6e
topology: v6e:2x2x1
jax: 0.10.0
libtpu: 0.0.40
codegen_flags: <defaults>
</compile_context>

<pallas_src>
import jax
import jax.numpy as jnp
from jax.experimental import pallas as pl
from jax.experimental.pallas import tpu as pltpu

INPUT_DIM = 768
HIDDEN_DIM = 512
OUTPUT_DIM = 1


def _round_up(n, m):
    return ((n + m - 1) // m) * m


def _mlp_kernel(x_ref, w1_ref, b1_ref, w2_ref, b2_ref, o_ref):
    # x:  (TB, 768) f32 (streamed)       w1: (768, 512) bf16 (resident, single-buffered)
    # b1: (1, 512)  f32 (resident)       w2: (1, 512)   f32  (resident, lane-major)
    # b2: (1, 1)    f32 in SMEM          o:  (TB, 1)    f32
    # In-kernel f32 -> bf16 cast (VPU has slack); keeps the MXU on the bf16 path while
    # x only crosses HBM once, as f32.
    x_bf = x_ref[...].astype(jnp.bfloat16)
    h = jnp.dot(x_bf, w1_ref[...], preferred_element_type=jnp.float32)   # MXU, f32 acc
    h = jnp.maximum(h + b1_ref[...], 0.0)                                # VPU, f32
    # Second linear (512 -> 1): elementwise multiply (VPU) + lane reduction (XLU);
    # both units have slack while the MXU / x-tile DMA do the real work.
    out = jnp.sum(h * w2_ref[...], axis=-1, keepdims=True) + b2_ref[0, 0]  # (TB, 1)
    o_ref[...] = out.astype(o_ref.dtype)


def prepare_params(w1, b1, w2, b2):
    """One-time parameter preparation (hoisted out of the per-call path).

    w1: (768, 512), b1: (512,), w2: (512, 1), b2: (1,).
    Returns (w1_bf16, b1_2d, w2_row, b2_scalar) in the layouts the kernel expects.
    """
    w1_bf = w1.astype(jnp.bfloat16)                               # MXU RHS, resident
    b1_2d = b1.reshape(1, HIDDEN_DIM).astype(jnp.float32)
    w2_row = w2.reshape(1, HIDDEN_DIM).astype(jnp.float32)        # lane-major 2nd-layer weights
    b2_sc = b2.reshape(1, 1).astype(jnp.float32)                  # scalar -> SMEM
    return w1_bf, b1_2d, w2_row, b2_sc


def text_classifier_forward(x, params, *, block_b=2048):
    """x: (B, 768) f32.  params: output of prepare_params()."""
    w1_bf, b1_2d, w2_row, b2_sc = params
    B = x.shape[0]
    assert x.shape == (B, INPUT_DIM)
    x = x.astype(jnp.float32)

    # Batch tile: multiple of 8 (f32 sublane tile), capped at block_b.
    # block_b=2048 -> double-buffered f32 x tiles ~12 MiB + resident weights <1 MiB,
    # within the explicit 32 MiB vmem limit on every generation (v5e/v6e/v7x).
    block_b = max(8, (block_b // 8) * 8)
    tb = min(block_b, _round_up(B, 8))
    # Guarantee >=2 grid steps for mid/large batches so v7x's two TensorCores both get
    # a tile under the "parallel" batch axis (single tile would idle half the chip).
    if B > 16 and pl.cdiv(B, tb) < 2:
        tb = max(8, _round_up(pl.cdiv(B, 2), 8))
    num_tiles = pl.cdiv(B, tb)

    cost = pl.CostEstimate(
        flops=2 * B * INPUT_DIM * HIDDEN_DIM + 2 * B * HIDDEN_DIM,
        transcendentals=0,
        bytes_accessed=(B * INPUT_DIM * 4 + w1_bf.size * 2 + b1_2d.size * 4
                        + w2_row.size * 4 + b2_sc.size * 4 + B * OUTPUT_DIM * 4),
    )

    out = pl.pallas_call(
        _mlp_kernel,
        out_shape=jax.ShapeDtypeStruct((B, OUTPUT_DIM), jnp.float32),
        grid=(num_tiles,),
        in_specs=[
            # x: streamed per batch tile (f32, cast in-kernel). Ragged last block is fine:
            # each output row depends only on its own input row; OOB rows are masked on store.
            pl.BlockSpec((tb, INPUT_DIM), lambda i: (i, 0)),
            # Resident operands: constant index_map -> fetched once, single-buffered.
            pl.BlockSpec((INPUT_DIM, HIDDEN_DIM), lambda i: (0, 0),
                         pipeline_mode=pl.Buffered(1)),                       # W1 (bf16)
            pl.BlockSpec((1, HIDDEN_DIM), lambda i: (0, 0),
                         pipeline_mode=pl.Buffered(1)),                       # b1
            pl.BlockSpec((1, HIDDEN_DIM), lambda i: (0, 0),
                         pipeline_mode=pl.Buffered(1)),                       # w2 row
            pl.BlockSpec(memory_space=pltpu.MemorySpace.SMEM),                # b2 scalar
        ],
        out_specs=pl.BlockSpec((tb, OUTPUT_DIM), lambda i: (i, 0)),
        compiler_params=pltpu.CompilerParams(
            dimension_semantics=("parallel",),     # batch tiles independent -> megacore sharding
            vmem_limit_bytes=32 * 1024 * 1024,     # makes tb=2048 safe on v5e's 16 MiB default too
        ),
        cost_estimate=cost,
    )(x, w1_bf, b1_2d, w2_row, b2_sc)

    return out


def init_params(key):
    """Deterministic parameter init (PyTorch nn.Linear-style uniform bounds)."""
    k1, k2, k3, k4 = jax.random.split(key, 4)
    bound1 = 1.0 / (INPUT_DIM ** 0.5)
    bound2 = 1.0 / (HIDDEN_DIM ** 0.5)
    # Stored already transposed to [in, out] for the kernel (PyTorch stores [out, in]).
    w1 = jax.random.uniform(k1, (INPUT_DIM, HIDDEN_DIM), jnp.float32, -bound1, bound1)
    b1 = jax.random.uniform(k2, (HIDDEN_DIM,), jnp.float32, -bound1, bound1)
    w2 = jax.random.uniform(k3, (HIDDEN_DIM, OUTPUT_DIM), jnp.float32, -bound2, bound2)
    b2 = jax.random.uniform(k4, (OUTPUT_DIM,), jnp.float32, -bound2, bound2)
    return w1, b1, w2, b2


if __name__ == "__main__":
    key = jax.random.PRNGKey(0)
    kx, kp = jax.random.split(key)

    w1, b1, w2, b2 = init_params(kp)
    params = prepare_params(w1, b1, w2, b2)

    def ref_fn(x):
        # Pure-JAX f32 reference (kernel uses bf16 MXU inputs -> relaxed tolerance).
        return jnp.maximum(x @ w1 + b1, 0.0) @ w2 + b2

    # Case 1: small, tile-aligned batch.
    B1 = 8
    x1 = jax.random.normal(kx, (B1, INPUT_DIM), jnp.float32)
    out1 = jax.block_until_ready(text_classifier_forward(x1, params))
    assert out1.shape == (B1, OUTPUT_DIM)
    assert jnp.allclose(out1, ref_fn(x1), atol=1e-2, rtol=1e-2), \
        float(jnp.max(jnp.abs(out1 - ref_fn(x1))))

    # Case 2: ragged, multi-tile batch (exercises the masked boundary block + 2-tile grid).
    B2 = 20
    x2 = jax.random.normal(jax.random.fold_in(kx, 1), (B2, INPUT_DIM), jnp.float32)
    out2 = jax.block_until_ready(text_classifier_forward(x2, params))
    assert out2.shape == (B2, OUTPUT_DIM)
    assert jnp.allclose(out2, ref_fn(x2), atol=1e-2, rtol=1e-2), \
        float(jnp.max(jnp.abs(out2 - ref_fn(x2))))

    print("KERNEL_OK")
</pallas_src>

<mosaic_0001>
module attributes {stable_mosaic.version = 11 : i64} {
  func.func @_mlp_kernel(%arg0: i32, %arg1: memref<8x768xf32, #tpu.memory_space<vmem>>, %arg2: memref<768x512xbf16, #tpu.memory_space<vmem>>, %arg3: memref<1x512xf32, #tpu.memory_space<vmem>>, %arg4: memref<1x512xf32, #tpu.memory_space<vmem>>, %arg5: memref<1x1xf32, #tpu.memory_space<smem>>, %arg6: memref<8x1xf32, #tpu.memory_space<vmem>>) attributes {dimension_semantics = [#tpu.dimension_semantics<parallel>], iteration_bounds = array<i64: 1>, scalar_prefetch = 0 : i64, scratch_operands = 0 : i64, tpu.core_type = #tpu.core_type<tc>, window_params = [{transform_indices = @transform_0, window_bounds = array<i64: 8, 768>}, {pipeline_mode = #tpu.pipeline_mode<synchronous>, transform_indices = @transform_1, window_bounds = array<i64: 768, 512>}, {pipeline_mode = #tpu.pipeline_mode<synchronous>, transform_indices = @transform_2, window_bounds = array<i64: 1, 512>}, {pipeline_mode = #tpu.pipeline_mode<synchronous>, transform_indices = @transform_3, window_bounds = array<i64: 1, 512>}, {transform_indices = @transform_4, window_bounds = array<i64: 1, 1>}, {transform_indices = @transform_5, window_bounds = array<i64: 8, 1>}]} {
    %c0 = arith.constant 0 : index
    %c0_0 = arith.constant 0 : index
    %0 = vector.load %arg1[%c0, %c0_0] : memref<8x768xf32, #tpu.memory_space<vmem>>, vector<8x768xf32>
    %1 = arith.truncf %0 : vector<8x768xf32> to vector<8x768xbf16>
    %c0_1 = arith.constant 0 : index
    %c0_2 = arith.constant 0 : index
    %2 = vector.load %arg2[%c0_1, %c0_2] : memref<768x512xbf16, #tpu.memory_space<vmem>>, vector<768x512xbf16>
    %cst = arith.constant dense<0.000000e+00> : vector<8x512xf32>
    %3 = tpu.matmul %1, %2, %cst {dimension_numbers = #tpu.dot_dimension_numbers<[1], [0], [0], [1], [0, 0, 1, 1], [], []>} : vector<8x768xbf16>, vector<768x512xbf16>, vector<8x512xf32> -> vector<8x512xf32>
    %c0_3 = arith.constant 0 : index
    %c0_4 = arith.constant 0 : index
    %4 = vector.load %arg3[%c0_3, %c0_4] : memref<1x512xf32, #tpu.memory_space<vmem>>, vector<1x512xf32>
    %5 = vector.broadcast %4 : vector<1x512xf32> to vector<8x512xf32>
    %6 = arith.addf %3, %5 : vector<8x512xf32>
    %cst_5 = arith.constant 0.000000e+00 : f32
    %7 = vector.broadcast %cst_5 : f32 to vector<8x512xf32>
    %8 = arith.maximumf %6, %7 : vector<8x512xf32>
    %c0_6 = arith.constant 0 : index
    %c0_7 = arith.constant 0 : index
    %9 = vector.load %arg4[%c0_6, %c0_7] : memref<1x512xf32, #tpu.memory_space<vmem>>, vector<1x512xf32>
    %10 = vector.broadcast %9 : vector<1x512xf32> to vector<8x512xf32>
    %11 = arith.mulf %8, %10 : vector<8x512xf32>
    %cst_8 = arith.constant dense<0.000000e+00> : vector<8xf32>
    %12 = vector.multi_reduction <add>, %11, %cst_8 [1] : vector<8x512xf32> to vector<8xf32>
    %13 = vector.shape_cast %12 : vector<8xf32> to vector<8x1xf32>
    %c0_9 = arith.constant 0 : index
    %c0_10 = arith.constant 0 : index
    %14 = memref.load %arg5[%c0_9, %c0_10] : memref<1x1xf32, #tpu.memory_space<smem>>
    %15 = vector.broadcast %14 : f32 to vector<8x1xf32>
    %16 = arith.addf %13, %15 : vector<8x1xf32>
    %c0_11 = arith.constant 0 : index
    %c0_12 = arith.constant 0 : index
    %17 = vector.load %arg6[%c0_11, %c0_12] : memref<8x1xf32, #tpu.memory_space<vmem>>, vector<8x1xf32>
    tpu.vector_store %arg6[%c0_11, %c0_12], %16 {strides = array<i32>} : memref<8x1xf32, #tpu.memory_space<vmem>>, vector<8x1xf32>,
    return
  }
  func.func @transform_0(%arg0: i32) -> (i32, i32) {
    %c0_i32 = arith.constant 0 : i32
    %c0_i32_0 = arith.constant 0 : i32
    return %arg0, %c0_i32 : i32, i32
  }
  func.func @transform_1(%arg0: i32) -> (i32, i32) {
    %c0_i32 = arith.constant 0 : i32
    %c0_i32_0 = arith.constant 0 : i32
    %c0_i32_1 = arith.constant 0 : i32
    return %c0_i32, %c0_i32_0 : i32, i32
  }
  func.func @transform_2(%arg0: i32) -> (i32, i32) {
    %c0_i32 = arith.constant 0 : i32
    %c0_i32_0 = arith.constant 0 : i32
    %c0_i32_1 = arith.constant 0 : i32
    return %c0_i32, %c0_i32_0 : i32, i32
  }
  func.func @transform_3(%arg0: i32) -> (i32, i32) {
    %c0_i32 = arith.constant 0 : i32
    %c0_i32_0 = arith.constant 0 : i32
    %c0_i32_1 = arith.constant 0 : i32
    return %c0_i32, %c0_i32_0 : i32, i32
  }
  func.func @transform_4(%arg0: i32) -> (i32, i32) {
    %c0_i32 = arith.constant 0 : i32
    %c0_i32_0 = arith.constant 0 : i32
    %c0_i32_1 = arith.constant 0 : i32
    return %c0_i32, %c0_i32_0 : i32, i32
  }
  func.func @transform_5(%arg0: i32) -> (i32, i32) {
    %c0_i32 = arith.constant 0 : i32
    %c0_i32_0 = arith.constant 0 : i32
    return %arg0, %c0_i32 : i32, i32
  }
}

</mosaic_0001>

<llo_original>
// kernel: tpu_custom_call.1
$region0: #{tpu_custom_call.1}
  #allocation0 [shape = 'u32[]', space=smem, size = 0x4, offset = 0x4, fixed_abs, tag = 'smem constant byte address 0x4 - core index']
  #allocation1 [shape = 'u32[144,128]{1,0:T(1,128)}', space=vmem, size = 0x12000, scoped, tag = 'internal scratch']
  #allocation2 [shape = 'f32[1,1]{1,0:T(1,128)S(6)}', space=smem, size = 0x200, scoped, tag = 'scoped memory for tpu_custom_call.1']
  %s0 = inlined_call_operand.hbm [shape: f32[8,768], index: 0, kind: input, shape index: {}]
  %s1 = inlined_call_operand.hbm [shape: bf16[768,512], index: 1, kind: input, shape index: {}]
  %s2 = inlined_call_operand.vmem [shape: f32[1,512], index: 2, kind: input, shape index: {}]
  %s3 = inlined_call_operand.hbm [shape: f32[1,512], index: 3, kind: input, shape index: {}]
  %s4 = inlined_call_operand.<no memory space> [shape: f32[1,1], index: 4, kind: input, shape index: {}]
  %s5 = inlined_call_operand.vmem [shape: f32[8,1], index: 5, kind: output, shape index: {}]
  %s6 = sld [smem:[#allocation0]]
  $region42: #{tpu_custom_call.1} parent=0
    _
  %s8 = ssub.s32 1, %s6
  %s9 = scalar_select 0, %s8, %s6
  %10 = sst [smem:[#allocation2]] %s4
  $region1: #{tpu_custom_call.1} parent=0
    #allocation3 [shape = 'u8[24576]{0}', space=vmem, size = 0x6000, scoped, tag = 'input window, operand 0, single buffered']
    #allocation4 [shape = 's32[1]{0}', space=sflag, size = 0x4, scoped, tag = 'scoped memory for tpu_custom_call.1']
    #allocation5 [shape = 'u8[786432]{0}', space=vmem, size = 0xc0000, scoped, tag = 'input window, operand 1, single buffered']
    #allocation6 [shape = 's32[1]{0}', space=sflag, size = 0x4, scoped, tag = 'scoped memory for tpu_custom_call.1']
    #allocation7 [shape = 'u8[2048]{0}', space=vmem, size = 0x800, scoped, tag = 'input window, operand 3, single buffered']
    %11 = vsyncpa [#allocation4], 0
    %12 = vsyncpa [#allocation6], 0
    // Predicated region
    $region2: #{tpu_custom_call.1} parent=1 // pred_check
      _
    $region3: #{tpu_custom_call.1} parent=1 // pred_check_branch
      %14 = sbr.rel (0) target = $region5
    $region4: #{tpu_custom_call.1} parent=1 // pred_region
      %s16 = ssub.s32 768, 768
      %17 = vsyncadd [#allocation4], %s16
      %s19 = sshll.u32 [#allocation3], 4
      %s20 = int_to_ptr.vmem [resolvable:$true] %s19
      %22 = dma.hbm_to_vmem [thread:$0]  %s0, 768, %s20, [#allocation4]
    $region5: #{tpu_custom_call.1} parent=1 // pred_fallthru
      _
    // Predicated region
    $region6: #{tpu_custom_call.1} parent=1 // pred_check
      _
    $region7: #{tpu_custom_call.1} parent=1 // pred_check_branch
      %24 = sbr.rel (0) target = $region9
    $region8: #{tpu_custom_call.1} parent=1 // pred_region
      %s26 = ssub.s32 24576, 24576
      %27 = vsyncadd [#allocation6], %s26
      %s28 = sshll.u32 [#allocation5], 4
      %s29 = int_to_ptr.vmem [resolvable:$true] %s28
      %34 = dma.hbm_to_vmem [thread:$0]  %s1, 24576, %s29, [#allocation6], 256, 256, 16
    $region9: #{tpu_custom_call.1} parent=1 // pred_fallthru
      _
    // Predicated region
    $region10: #{tpu_custom_call.1} parent=1 // pred_check
      _
    $region11: #{tpu_custom_call.1} parent=1 // pred_check_branch
      %36 = sbr.rel (0) target = $region13
    $region12: #{tpu_custom_call.1} parent=1 // pred_region
      _
    $region13: #{tpu_custom_call.1} parent=1 // pred_fallthru
      _
    // Predicated region
    $region14: #{tpu_custom_call.1} parent=1 // pred_check
      _
    $region15: #{tpu_custom_call.1} parent=1 // pred_check_branch
      %38 = sbr.rel (0) target = $region17
    $region16: #{tpu_custom_call.1} parent=1 // pred_region
      %s40 = ssub.s32 64, 64
      %41 = vsyncadd [#allocation6], %s40
      %s43 = sshll.u32 [#allocation7], 4
      %s44 = int_to_ptr.vmem [resolvable:$true] %s43
      %46 = dma.hbm_to_vmem [thread:$0]  %s3, 64, %s44, [#allocation6]
    $region17: #{tpu_custom_call.1} parent=1 // pred_fallthru
      _
    // Predicated region
    $region18: #{tpu_custom_call.1} parent=1 // pred_check
      _
    $region19: #{tpu_custom_call.1} parent=1 // pred_check_branch
      %48 = sbr.rel (0) target = $region21
    $region20: #{tpu_custom_call.1} parent=1 // pred_region
      _
    $region21: #{tpu_custom_call.1} parent=1 // pred_fallthru
      _
    // Predicated region
    $region22: #{tpu_custom_call.1} parent=1 // pred_check
      _
    $region23: #{tpu_custom_call.1} parent=1 // pred_check_branch
      %50 = sbr.rel (0) target = $region25
    $region24: #{tpu_custom_call.1} parent=1 // pred_region
      %51 = dma.done [#allocation4], 768
    $region25: #{tpu_custom_call.1} parent=1 // pred_fallthru
      _
    // Predicated region
    $region26: #{tpu_custom_call.1} parent=1 // pred_check
      _
    $region27: #{tpu_custom_call.1} parent=1 // pred_check_branch
      %53 = sbr.rel (0) target = $region29
    $region28: #{tpu_custom_call.1} parent=1 // pred_region
      %54 = dma.done [#allocation6], 24576
    $region29: #{tpu_custom_call.1} parent=1 // pred_fallthru
      _
    // Predicated region
    $region30: #{tpu_custom_call.1} parent=1 // pred_check
      _
    $region31: #{tpu_custom_call.1} parent=1 // pred_check_branch
      %56 = sbr.rel (0) target = $region33
    $region32: #{tpu_custom_call.1} parent=1 // pred_region
      %57 = dma.done [#allocation6], 64
    $region33: #{tpu_custom_call.1} parent=1 // pred_fallthru
      _
    %v58 = vld [vmem:[#allocation3] sm:$0xff]
    %v59 = vld [vmem:[#allocation3 + $0x8] sm:$0xff]
    %v60 = vld [vmem:[#allocation3 + $0x10] sm:$0xff]
    %v61 = vld [vmem:[#allocation3 + $0x18] sm:$0xff]
    %v62 = vld [vmem:[#allocation3 + $0x20] sm:$0xff]
    %v63 = vld [vmem:[#allocation3 + $0x28] sm:$0xff]
    %v64 = vpack.c.bf16 %v58, %v58
    %v65 = vpack.c.bf16 %v59, %v59
    %v66 = vpack.c.bf16 %v60, %v60
    %v67 = vpack.c.bf16 %v61, %v61
    %v68 = vpack.c.bf16 %v62, %v62
    %v69 = vpack.c.bf16 %v63, %v63
    %v70 = vld [vmem:[#allocation5] sm:$0xff]
    %v71 = vld [vmem:[#allocation5 + $0x8] sm:$0xff]
    %v72 = vld [vmem:[#allocation5 + $0x10] sm:$0xff]
    %v73 = vld [vmem:[#allocation5 + $0x18] sm:$0xff]
    %v74 = vld [vmem:[#allocation5 + $0x20] sm:$0xff]
    %v75 = vld [vmem:[#allocation5 + $0x28] sm:$0xff]
    %v76 = vld [vmem:[#allocation5 + $0x30] sm:$0xff]
    %v77 = vld [vmem:[#allocation5 + $0x38] sm:$0xff]
    %v78 = vld [vmem:[#allocation5 + $0x40] sm:$0xff]
    %v79 = vld [vmem:[#allocation5 + $0x48] sm:$0xff]
    %v80 = vld [vmem:[#allocation5 + $0x50] sm:$0xff]
    %v81 = vld [vmem:[#allocation5 + $0x58] sm:$0xff]
    %v82 = vld [vmem:[#allocation5 + $0x60] sm:$0xff]
    %v83 = vld [vmem:[#allocation5 + $0x68] sm:$0xff]
    %v84 = vld [vmem:[#allocation5 + $0x70] sm:$0xff]
    %v85 = vld [vmem:[#allocation5 + $0x78] sm:$0xff]
    %v86 = vld [vmem:[#allocation5 + $0x80] sm:$0xff]
    %v87 = vld [vmem:[#allocation5 + $0x88] sm:$0xff]
    %v88 = vld [vmem:[#allocation5 + $0x90] sm:$0xff]
    %v89 = vld [vmem:[#allocation5 + $0x98] sm:$0xff]
    %v90 = vld [vmem:[#allocation5 + $0xa0] sm:$0xff]
    %v91 = vld [vmem:[#allocation5 + $0xa8] sm:$0xff]
    %v92 = vld [vmem:[#allocation5 + $0xb0] sm:$0xff]
    %v93 = vld [vmem:[#allocation5 + $0xb8] sm:$0xff]
    %v94 = vld [vmem:[#allocation5 + $0xc0] sm:$0xff]
    %v95 = vld [vmem:[#allocation5 + $0xc8] sm:$0xff]
    %v96 = vld [vmem:[#allocation5 + $0xd0] sm:$0xff]
    %v97 = vld [vmem:[#allocation5 + $0xd8] sm:$0xff]
    %v98 = vld [vmem:[#allocation5 + $0xe0] sm:$0xff]
    %v99 = vld [vmem:[#allocation5 + $0xe8] sm:$0xff]
    %v100 = vld [vmem:[#allocation5 + $0xf0] sm:$0xff]
    %v101 = vld [vmem:[#allocation5 + $0xf8] sm:$0xff]
    %v102 = vld [vmem:[#allocation5 + $0x100] sm:$0xff]
    %v103 = vld [vmem:[#allocation5 + $0x108] sm:$0xff]
    %v104 = vld [vmem:[#allocation5 + $0x110] sm:$0xff]
    %v105 = vld [vmem:[#allocation5 + $0x118] sm:$0xff]
    %v106 = vld [vmem:[#allocation5 + $0x120] sm:$0xff]
    %v107 = vld [vmem:[#allocation5 + $0x128] sm:$0xff]
    %v108 = vld [vmem:[#allocation5 + $0x130] sm:$0xff]
    %v109 = vld [vmem:[#allocation5 + $0x138] sm:$0xff]
    %v110 = vld [vmem:[#allocation5 + $0x140] sm:$0xff]
    %v111 = vld [vmem:[#allocation5 + $0x148] sm:$0xff]
    %v112 = vld [vmem:[#allocation5 + $0x150] sm:$0xff]
    %v113 = vld [vmem:[#allocation5 + $0x158] sm:$0xff]
    %v114 = vld [vmem:[#allocation5 + $0x160] sm:$0xff]
    %v115 = vld [vmem:[#allocation5 + $0x168] sm:$0xff]
    %v116 = vld [vmem:[#allocation5 + $0x170] sm:$0xff]
    %v117 = vld [vmem:[#allocation5 + $0x178] sm:$0xff]
    %v118 = vld [vmem:[#allocation5 + $0x180] sm:$0xff]
    %v119 = vld [vmem:[#allocation5 + $0x188] sm:$0xff]
    %v120 = vld [vmem:[#allocation5 + $0x190] sm:$0xff]
    %v121 = vld [vmem:[#allocation5 + $0x198] sm:$0xff]
    %v122 = vld [vmem:[#allocation5 + $0x1a0] sm:$0xff]
    %v123 = vld [vmem:[#allocation5 + $0x1a8] sm:$0xff]
    %v124 = vld [vmem:[#allocation5 + $0x1b0] sm:$0xff]
    %v125 = vld [vmem:[#allocation5 + $0x1b8] sm:$0xff]
    %v126 = vld [vmem:[#allocation5 + $0x1c0] sm:$0xff]
    %v127 = vld [vmem:[#allocation5 + $0x1c8] sm:$0xff]
    %v128 = vld [vmem:[#allocation5 + $0x1d0] sm:$0xff]
    %v129 = vld [vmem:[#allocation5 + $0x1d8] sm:$0xff]
    %v130 = vld [vmem:[#allocation5 + $0x1e0] sm:$0xff]
    %v131 = vld [vmem:[#allocation5 + $0x1e8] sm:$0xff]
    %v132 = vld [vmem:[#allocation5 + $0x1f0] sm:$0xff]
    %v133 = vld [vmem:[#allocation5 + $0x1f8] sm:$0xff]
    %v134 = vld [vmem:[#allocation5 + $0x200] sm:$0xff]
    %v135 = vld [vmem:[#allocation5 + $0x208] sm:$0xff]
    %v136 = vld [vmem:[#allocation5 + $0x210] sm:$0xff]
    %v137 = vld [vmem:[#allocation5 + $0x218] sm:$0xff]
    %v138 = vld [vmem:[#allocation5 + $0x220] sm:$0xff]
    %v139 = vld [vmem:[#allocation5 + $0x228] sm:$0xff]
    %v140 = vld [vmem:[#allocation5 + $0x230] sm:$0xff]
    %v141 = vld [vmem:[#allocation5 + $0x238] sm:$0xff]
    %v142 = vld [vmem:[#allocation5 + $0x240] sm:$0xff]
    %v143 = vld [vmem:[#allocation5 + $0x248] sm:$0xff]
    %v144 = vld [vmem:[#allocation5 + $0x250] sm:$0xff]
    %v145 = vld [vmem:[#allocation5 + $0x258] sm:$0xff]
    %v146 = vld [vmem:[#allocation5 + $0x260] sm:$0xff]
    %v147 = vld [vmem:[#allocation5 + $0x268] sm:$0xff]
    %v148 = vld [vmem:[#allocation5 + $0x270] sm:$0xff]
    %v149 = vld [vmem:[#allocation5 + $0x278] sm:$0xff]
    %v150 = vld [vmem:[#allocation5 + $0x280] sm:$0xff]
    %v151 = vld [vmem:[#allocation5 + $0x288] sm:$0xff]
    %v152 = vld [vmem:[#allocation5 + $0x290] sm:$0xff]
    %v153 = vld [vmem:[#allocation5 + $0x298] sm:$0xff]
    %v154 = vld [vmem:[#allocation5 + $0x2a0] sm:$0xff]
    %v155 = vld [vmem:[#allocation5 + $0x2a8] sm:$0xff]
    %v156 = vld [vmem:[#allocation5 + $0x2b0] sm:$0xff]
    %v157 = vld [vmem:[#allocation5 + $0x2b8] sm:$0xff]
    %v158 = vld [vmem:[#allocation5 + $0x2c0] sm:$0xff]
    %v159 = vld [vmem:[#allocation5 + $0x2c8] sm:$0xff]
    %v160 = vld [vmem:[#allocation5 + $0x2d0] sm:$0xff]
    %v161 = vld [vmem:[#allocation5 + $0x2d8] sm:$0xff]
    %v162 = vld [vmem:[#allocation5 + $0x2e0] sm:$0xff]
    %v163 = vld [vmem:[#allocation5 + $0x2e8] sm:$0xff]
    %v164 = vld [vmem:[#allocation5 + $0x2f0] sm:$0xff]
    %v165 = vld [vmem:[#allocation5 + $0x2f8] sm:$0xff]
    %v166 = vld [vmem:[#allocation5 + $0x300] sm:$0xff]
    %v167 = vld [vmem:[#allocation5 + $0x308] sm:$0xff]
    %v168 = vld [vmem:[#allocation5 + $0x310] sm:$0xff]
    %v169 = vld [vmem:[#allocation5 + $0x318] sm:$0xff]
    %v170 = vld [vmem:[#allocation5 + $0x320] sm:$0xff]
    %v171 = vld [vmem:[#allocation5 + $0x328] sm:$0xff]
    %v172 = vld [vmem:[#allocation5 + $0x330] sm:$0xff]
    %v173 = vld [vmem:[#allocation5 + $0x338] sm:$0xff]
    %v174 = vld [vmem:[#allocation5 + $0x340] sm:$0xff]
    %v175 = vld [vmem:[#allocation5 + $0x348] sm:$0xff]
    %v176 = vld [vmem:[#allocation5 + $0x350] sm:$0xff]
    %v177 = vld [vmem:[#allocation5 + $0x358] sm:$0xff]
    %v178 = vld [vmem:[#allocation5 + $0x360] sm:$0xff]
    %v179 = vld [vmem:[#allocation5 + $0x368] sm:$0xff]
    %v180 = vld [vmem:[#allocation5 + $0x370] sm:$0xff]
    %v181 = vld [vmem:[#allocation5 + $0x378] sm:$0xff]
    %v182 = vld [vmem:[#allocation5 + $0x380] sm:$0xff]
    %v183 = vld [vmem:[#allocation5 + $0x388] sm:$0xff]
    %v184 = vld [vmem:[#allocation5 + $0x390] sm:$0xff]
    %v185 = vld [vmem:[#allocation5 + $0x398] sm:$0xff]
    %v186 = vld [vmem:[#allocation5 + $0x3a0] sm:$0xff]
    %v187 = vld [vmem:[#allocation5 + $0x3a8] sm:$0xff]
    %v188 = vld [vmem:[#allocation5 + $0x3b0] sm:$0xff]
    %v189 = vld [vmem:[#allocation5 + $0x3b8] sm:$0xff]
    %v190 = vld [vmem:[#allocation5 + $0x3c0] sm:$0xff]
    %v191 = vld [vmem:[#allocation5 + $0x3c8] sm:$0xff]
    %v192 = vld [vmem:[#allocation5 + $0x3d0] sm:$0xff]
    %v193 = vld [vmem:[#allocation5 + $0x3d8] sm:$0xff]
    %v194 = vld [vmem:[#allocation5 + $0x3e0] sm:$0xff]
    %v195 = vld [vmem:[#allocation5 + $0x3e8] sm:$0xff]
    %v196 = vld [vmem:[#allocation5 + $0x3f0] sm:$0xff]
    %v197 = vld [vmem:[#allocation5 + $0x3f8] sm:$0xff]
    %v198 = vld [vmem:[#allocation5 + $0x400] sm:$0xff]
    %v199 = vld [vmem:[#allocation5 + $0x408] sm:$0xff]
    %v200 = vld [vmem:[#allocation5 + $0x410] sm:$0xff]
    %v201 = vld [vmem:[#allocation5 + $0x418] sm:$0xff]
    %v202 = vld [vmem:[#allocation5 + $0x420] sm:$0xff]
    %v203 = vld [vmem:[#allocation5 + $0x428] sm:$0xff]
    %v204 = vld [vmem:[#allocation5 + $0x430] sm:$0xff]
    %v205 = vld [vmem:[#allocation5 + $0x438] sm:$0xff]
    %v206 = vld [vmem:[#allocation5 + $0x440] sm:$0xff]
    %v207 = vld [vmem:[#allocation5 + $0x448] sm:$0xff]
    %v208 = vld [vmem:[#allocation5 + $0x450] sm:$0xff]
    %v209 = vld [vmem:[#allocation5 + $0x458] sm:$0xff]
    %v210 = vld [vmem:[#allocation5 + $0x460] sm:$0xff]
    %v211 = vld [vmem:[#allocation5 + $0x468] sm:$0xff]
    %v212 = vld [vmem:[#allocation5 + $0x470] sm:$0xff]
    %v213 = vld [vmem:[#allocation5 + $0x478] sm:$0xff]
    %v214 = vld [vmem:[#allocation5 + $0x480] sm:$0xff]
    %v215 = vld [vmem:[#allocation5 + $0x488] sm:$0xff]
    %v216 = vld [vmem:[#allocation5 + $0x490] sm:$0xff]
    %v217 = vld [vmem:[#allocation5 + $0x498] sm:$0xff]
    %v218 = vld [vmem:[#allocation5 + $0x4a0] sm:$0xff]
    %v219 = vld [vmem:[#allocation5 + $0x4a8] sm:$0xff]
    %v220 = vld [vmem:[#allocation5 + $0x4b0] sm:$0xff]
    %v221 = vld [vmem:[#allocation5 + $0x4b8] sm:$0xff]
    %v222 = vld [vmem:[#allocation5 + $0x4c0] sm:$0xff]
    %v223 = vld [vmem:[#allocation5 + $0x4c8] sm:$0xff]
    %v224 = vld [vmem:[#allocation5 + $0x4d0] sm:$0xff]
    %v225 = vld [vmem:[#allocation5 + $0x4d8] sm:$0xff]
    %v226 = vld [vmem:[#allocation5 + $0x4e0] sm:$0xff]
    %v227 = vld [vmem:[#allocation5 + $0x4e8] sm:$0xff]
    %v228 = vld [vmem:[#allocation5 + $0x4f0] sm:$0xff]
    %v229 = vld [vmem:[#allocation5 + $0x4f8] sm:$0xff]
    %v230 = vld [vmem:[#allocation5 + $0x500] sm:$0xff]
    %v231 = vld [vmem:[#allocation5 + $0x508] sm:$0xff]
    %v232 = vld [vmem:[#allocation5 + $0x510] sm:$0xff]
    %v233 = vld [vmem:[#allocation5 + $0x518] sm:$0xff]
    %v234 = vld [vmem:[#allocation5 + $0x520] sm:$0xff]
    %v235 = vld [vmem:[#allocation5 + $0x528] sm:$0xff]
    %v236 = vld [vmem:[#allocation5 + $0x530] sm:$0xff]
    %v237 = vld [vmem:[#allocation5 + $0x538] sm:$0xff]
    %v238 = vld [vmem:[#allocation5 + $0x540] sm:$0xff]
    %v239 = vld [vmem:[#allocation5 + $0x548] sm:$0xff]
    %v240 = vld [vmem:[#allocation5 + $0x550] sm:$0xff]
    %v241 = vld [vmem:[#allocation5 + $0x558] sm:$0xff]
    %v242 = vld [vmem:[#allocation5 + $0x560] sm:$0xff]
    %v243 = vld [vmem:[#allocation5 + $0x568] sm:$0xff]
    %v244 = vld [vmem:[#allocation5 + $0x570] sm:$0xff]
    %v245 = vld [vmem:[#allocation5 + $0x578] sm:$0xff]
    %v246 = vld [vmem:[#allocation5 + $0x580] sm:$0xff]
    %v247 = vld [vmem:[#allocation5 + $0x588] sm:$0xff]
    %v248 = vld [vmem:[#allocation5 + $0x590] sm:$0xff]
    %v249 = vld [vmem:[#allocation5 + $0x598] sm:$0xff]
    %v250 = vld [vmem:[#allocation5 + $0x5a0] sm:$0xff]
    %v251 = vld [vmem:[#allocation5 + $0x5a8] sm:$0xff]
    %v252 = vld [vmem:[#allocation5 + $0x5b0] sm:$0xff]
    %v253 = vld [vmem:[#allocation5 + $0x5b8] sm:$0xff]
    %v254 = vld [vmem:[#allocation5 + $0x5c0] sm:$0xff]
    %v255 = vld [vmem:[#allocation5 + $0x5c8] sm:$0xff]
    %v256 = vld [vmem:[#allocation5 + $0x5d0] sm:$0xff]
    %v257 = vld [vmem:[#allocation5 + $0x5d8] sm:$0xff]
    %v258 = vld [vmem:[#allocation5 + $0x5e0] sm:$0xff]
    %v259 = vld [vmem:[#allocation5 + $0x5e8] sm:$0xff]
    %v260 = vld [vmem:[#allocation5 + $0x5f0] sm:$0xff]
    %v261 = vld [vmem:[#allocation5 + $0x5f8] sm:$0xff]
    %v262 = vld [vmem:[%s2] sm:$0xf]
    %v264 = vlaneseq
    %v265 = vshrl.u32 %v264, 7
    %v266 = vsub.s32 0, %v265
    %v267 = vrot.slane %v262, %v266
    %v268 = vlaneseq
    %v269 = vshrl.u32 %v268, 7
    %v270 = vsub.s32 1, %v269
    %v271 = vrot.slane %v262, %v270
    %v272 = vlaneseq
    %v273 = vshrl.u32 %v272, 7
    %v274 = vsub.s32 2, %v273
    %v275 = vrot.slane %v262, %v274
    %v276 = vlaneseq
    %v277 = vshrl.u32 %v276, 7
    %v278 = vsub.s32 3, %v277
    %v279 = vrot.slane %v262, %v278
    %v476 = vunpack.c.l.b16 %v70
    %v477 = vunpack.c.h.b16 %v70
    %v478 = vunpack.c.l.b16 %v71
    %v479 = vunpack.c.h.b16 %v71
    %v480 = vunpack.c.l.b16 %v72
    %v481 = vunpack.c.h.b16 %v72
    %v482 = vunpack.c.l.b16 %v73
    %v483 = vunpack.c.h.b16 %v73
    %v484 = vunpack.c.l.b16 %v74
    %v485 = vunpack.c.h.b16 %v74
    %v486 = vunpack.c.l.b16 %v75
    %v487 = vunpack.c.h.b16 %v75
    %v488 = vunpack.c.l.b16 %v76
    %v489 = vunpack.c.h.b16 %v76
    %v490 = vunpack.c.l.b16 %v77
    %v491 = vunpack.c.h.b16 %v77
    %v492 = vunpack.c.l.b16 %v78
    %v493 = vunpack.c.h.b16 %v78
    %v494 = vunpack.c.l.b16 %v79
    %v495 = vunpack.c.h.b16 %v79
    %v496 = vunpack.c.l.b16 %v80
    %v497 = vunpack.c.h.b16 %v80
    %v498 = vunpack.c.l.b16 %v81
    %v499 = vunpack.c.h.b16 %v81
    %v500 = vunpack.c.l.b16 %v82
    %v501 = vunpack.c.h.b16 %v82
    %v502 = vunpack.c.l.b16 %v83
    %v503 = vunpack.c.h.b16 %v83
    %v504 = vunpack.c.l.b16 %v84
    %v505 = vunpack.c.h.b16 %v84
    %v506 = vunpack.c.l.b16 %v85
    %v507 = vunpack.c.h.b16 %v85
    %v508 = vunpack.c.l.b16 %v86
    %v509 = vunpack.c.h.b16 %v86
    %v510 = vunpack.c.l.b16 %v87
    %v511 = vunpack.c.h.b16 %v87
    %v512 = vunpack.c.l.b16 %v88
    %v513 = vunpack.c.h.b16 %v88
    %v514 = vunpack.c.l.b16 %v89
    %v515 = vunpack.c.h.b16 %v89
    %v516 = vunpack.c.l.b16 %v90
    %v517 = vunpack.c.h.b16 %v90
    %v518 = vunpack.c.l.b16 %v91
    %v519 = vunpack.c.h.b16 %v91
    %v520 = vunpack.c.l.b16 %v92
    %v521 = vunpack.c.h.b16 %v92
    %v522 = vunpack.c.l.b16 %v93
    %v523 = vunpack.c.h.b16 %v93
    %v524 = vunpack.c.l.b16 %v94
    %v525 = vunpack.c.h.b16 %v94
    %v526 = vunpack.c.l.b16 %v95
    %v527 = vunpack.c.h.b16 %v95
    %v528 = vunpack.c.l.b16 %v96
    %v529 = vunpack.c.h.b16 %v96
    %v530 = vunpack.c.l.b16 %v97
    %v531 = vunpack.c.h.b16 %v97
    %v532 = vunpack.c.l.b16 %v98
    %v533 = vunpack.c.h.b16 %v98
    %v534 = vunpack.c.l.b16 %v99
    %v535 = vunpack.c.h.b16 %v99
    %v536 = vunpack.c.l.b16 %v100
    %v537 = vunpack.c.h.b16 %v100
    %v538 = vunpack.c.l.b16 %v101
    %v539 = vunpack.c.h.b16 %v101
    %v540 = vunpack.c.l.b16 %v102
    %v541 = vunpack.c.h.b16 %v102
    %v542 = vunpack.c.l.b16 %v103
    %v543 = vunpack.c.h.b16 %v103
    %v544 = vunpack.c.l.b16 %v104
    %v545 = vunpack.c.h.b16 %v104
    %v546 = vunpack.c.l.b16 %v105
    %v547 = vunpack.c.h.b16 %v105
    %v548 = vunpack.c.l.b16 %v106
    %v549 = vunpack.c.h.b16 %v106
    %v550 = vunpack.c.l.b16 %v107
    %v551 = vunpack.c.h.b16 %v107
    %v552 = vunpack.c.l.b16 %v108
    %v553 = vunpack.c.h.b16 %v108
    %v554 = vunpack.c.l.b16 %v109
    %v555 = vunpack.c.h.b16 %v109
    %v556 = vunpack.c.l.b16 %v110
    %v557 = vunpack.c.h.b16 %v110
    %v558 = vunpack.c.l.b16 %v111
    %v559 = vunpack.c.h.b16 %v111
    %v560 = vunpack.c.l.b16 %v112
    %v561 = vunpack.c.h.b16 %v112
    %v562 = vunpack.c.l.b16 %v113
    %v563 = vunpack.c.h.b16 %v113
    %v564 = vunpack.c.l.b16 %v114
    %v565 = vunpack.c.h.b16 %v114
    %v566 = vunpack.c.l.b16 %v115
    %v567 = vunpack.c.h.b16 %v115
    %v568 = vunpack.c.l.b16 %v116
    %v569 = vunpack.c.h.b16 %v116
    %v570 = vunpack.c.l.b16 %v117
    %v571 = vunpack.c.h.b16 %v117
    %v572 = vunpack.c.l.b16 %v118
    %v573 = vunpack.c.h.b16 %v118
    %v574 = vunpack.c.l.b16 %v119
    %v575 = vunpack.c.h.b16 %v119
    %v576 = vunpack.c.l.b16 %v120
    %v577 = vunpack.c.h.b16 %v120
    %v578 = vunpack.c.l.b16 %v121
    %v579 = vunpack.c.h.b16 %v121
    %v580 = vunpack.c.l.b16 %v122
    %v581 = vunpack.c.h.b16 %v122
    %v582 = vunpack.c.l.b16 %v123
    %v583 = vunpack.c.h.b16 %v123
    %v584 = vunpack.c.l.b16 %v124
    %v585 = vunpack.c.h.b16 %v124
    %v586 = vunpack.c.l.b16 %v125
    %v587 = vunpack.c.h.b16 %v125
    %v588 = vunpack.c.l.b16 %v126
    %v589 = vunpack.c.h.b16 %v126
    %v590 = vunpack.c.l.b16 %v127
    %v591 = vunpack.c.h.b16 %v127
    %v592 = vunpack.c.l.b16 %v128
    %v593 = vunpack.c.h.b16 %v128
    %v594 = vunpack.c.l.b16 %v129
    %v595 = vunpack.c.h.b16 %v129
    %v596 = vunpack.c.l.b16 %v130
    %v597 = vunpack.c.h.b16 %v130
    %v598 = vunpack.c.l.b16 %v131
    %v599 = vunpack.c.h.b16 %v131
    %v600 = vunpack.c.l.b16 %v132
    %v601 = vunpack.c.h.b16 %v132
    %v602 = vunpack.c.l.b16 %v133
    %v603 = vunpack.c.h.b16 %v133
    %v604 = vunpack.c.l.b16 %v134
    %v605 = vunpack.c.h.b16 %v134
    %v606 = vunpack.c.l.b16 %v135
    %v607 = vunpack.c.h.b16 %v135
    %v608 = vunpack.c.l.b16 %v136
    %v609 = vunpack.c.h.b16 %v136
    %v610 = vunpack.c.l.b16 %v137
    %v611 = vunpack.c.h.b16 %v137
    %v612 = vunpack.c.l.b16 %v138
    %v613 = vunpack.c.h.b16 %v138
    %v614 = vunpack.c.l.b16 %v139
    %v615 = vunpack.c.h.b16 %v139
    %v616 = vunpack.c.l.b16 %v140
    %v617 = vunpack.c.h.b16 %v140
    %v618 = vunpack.c.l.b16 %v141
    %v619 = vunpack.c.h.b16 %v141
    %v620 = vunpack.c.l.b16 %v142
    %v621 = vunpack.c.h.b16 %v142
    %v622 = vunpack.c.l.b16 %v143
    %v623 = vunpack.c.h.b16 %v143
    %v624 = vunpack.c.l.b16 %v144
    %v625 = vunpack.c.h.b16 %v144
    %v626 = vunpack.c.l.b16 %v145
    %v627 = vunpack.c.h.b16 %v145
    %v628 = vunpack.c.l.b16 %v146
    %v629 = vunpack.c.h.b16 %v146
    %v630 = vunpack.c.l.b16 %v147
    %v631 = vunpack.c.h.b16 %v147
    %v632 = vunpack.c.l.b16 %v148
    %v633 = vunpack.c.h.b16 %v148
    %v634 = vunpack.c.l.b16 %v149
    %v635 = vunpack.c.h.b16 %v149
    %v636 = vunpack.c.l.b16 %v150
    %v637 = vunpack.c.h.b16 %v150
    %v638 = vunpack.c.l.b16 %v151
    %v639 = vunpack.c.h.b16 %v151
    %v640 = vunpack.c.l.b16 %v152
    %v641 = vunpack.c.h.b16 %v152
    %v642 = vunpack.c.l.b16 %v153
    %v643 = vunpack.c.h.b16 %v153
    %v644 = vunpack.c.l.b16 %v154
    %v645 = vunpack.c.h.b16 %v154
    %v646 = vunpack.c.l.b16 %v155
    %v647 = vunpack.c.h.b16 %v155
    %v648 = vunpack.c.l.b16 %v156
    %v649 = vunpack.c.h.b16 %v156
    %v650 = vunpack.c.l.b16 %v157
    %v651 = vunpack.c.h.b16 %v157
    %v652 = vunpack.c.l.b16 %v158
    %v653 = vunpack.c.h.b16 %v158
    %v654 = vunpack.c.l.b16 %v159
    %v655 = vunpack.c.h.b16 %v159
    %v656 = vunpack.c.l.b16 %v160
    %v657 = vunpack.c.h.b16 %v160
    %v658 = vunpack.c.l.b16 %v161
    %v659 = vunpack.c.h.b16 %v161
    %v660 = vunpack.c.l.b16 %v162
    %v661 = vunpack.c.h.b16 %v162
    %v662 = vunpack.c.l.b16 %v163
    %v663 = vunpack.c.h.b16 %v163
    %v664 = vunpack.c.l.b16 %v164
    %v665 = vunpack.c.h.b16 %v164
    %v666 = vunpack.c.l.b16 %v165
    %v667 = vunpack.c.h.b16 %v165
    %v668 = vunpack.c.l.b16 %v166
    %v669 = vunpack.c.h.b16 %v166
    %v670 = vunpack.c.l.b16 %v167
    %v671 = vunpack.c.h.b16 %v167
    %v672 = vunpack.c.l.b16 %v168
    %v673 = vunpack.c.h.b16 %v168
    %v674 = vunpack.c.l.b16 %v169
    %v675 = vunpack.c.h.b16 %v169
    %v676 = vunpack.c.l.b16 %v170
    %v677 = vunpack.c.h.b16 %v170
    %v678 = vunpack.c.l.b16 %v171
    %v679 = vunpack.c.h.b16 %v171
    %v680 = vunpack.c.l.b16 %v172
    %v681 = vunpack.c.h.b16 %v172
    %v682 = vunpack.c.l.b16 %v173
    %v683 = vunpack.c.h.b16 %v173
    %v684 = vunpack.c.l.b16 %v174
    %v685 = vunpack.c.h.b16 %v174
    %v686 = vunpack.c.l.b16 %v175
    %v687 = vunpack.c.h.b16 %v175
    %v688 = vunpack.c.l.b16 %v176
    %v689 = vunpack.c.h.b16 %v176
    %v690 = vunpack.c.l.b16 %v177
    %v691 = vunpack.c.h.b16 %v177
    %v692 = vunpack.c.l.b16 %v178
    %v693 = vunpack.c.h.b16 %v178
    %v694 = vunpack.c.l.b16 %v179
    %v695 = vunpack.c.h.b16 %v179
    %v696 = vunpack.c.l.b16 %v180
    %v697 = vunpack.c.h.b16 %v180
    %v698 = vunpack.c.l.b16 %v181
    %v699 = vunpack.c.h.b16 %v181
    %v700 = vunpack.c.l.b16 %v182
    %v701 = vunpack.c.h.b16 %v182
    %v702 = vunpack.c.l.b16 %v183
    %v703 = vunpack.c.h.b16 %v183
    %v704 = vunpack.c.l.b16 %v184
    %v705 = vunpack.c.h.b16 %v184
    %v706 = vunpack.c.l.b16 %v185
    %v707 = vunpack.c.h.b16 %v185
    %v708 = vunpack.c.l.b16 %v186
    %v709 = vunpack.c.h.b16 %v186
    %v710 = vunpack.c.l.b16 %v187
    %v711 = vunpack.c.h.b16 %v187
    %v712 = vunpack.c.l.b16 %v188
    %v713 = vunpack.c.h.b16 %v188
    %v714 = vunpack.c.l.b16 %v189
    %v715 = vunpack.c.h.b16 %v189
    %v716 = vunpack.c.l.b16 %v190
    %v717 = vunpack.c.h.b16 %v190
    %v718 = vunpack.c.l.b16 %v191
    %v719 = vunpack.c.h.b16 %v191
    %v720 = vunpack.c.l.b16 %v192
    %v721 = vunpack.c.h.b16 %v192
    %v722 = vunpack.c.l.b16 %v193
    %v723 = vunpack.c.h.b16 %v193
    %v724 = vunpack.c.l.b16 %v194
    %v725 = vunpack.c.h.b16 %v194
    %v726 = vunpack.c.l.b16 %v195
    %v727 = vunpack.c.h.b16 %v195
    %v728 = vunpack.c.l.b16 %v196
    %v729 = vunpack.c.h.b16 %v196
    %v730 = vunpack.c.l.b16 %v197
    %v731 = vunpack.c.h.b16 %v197
    %v732 = vunpack.c.l.b16 %v198
    %v733 = vunpack.c.h.b16 %v198
    %v734 = vunpack.c.l.b16 %v199
    %v735 = vunpack.c.h.b16 %v199
    %v736 = vunpack.c.l.b16 %v200
    %v737 = vunpack.c.h.b16 %v200
    %v738 = vunpack.c.l.b16 %v201
    %v739 = vunpack.c.h.b16 %v201
    %v740 = vunpack.c.l.b16 %v202
    %v741 = vunpack.c.h.b16 %v202
    %v742 = vunpack.c.l.b16 %v203
    %v743 = vunpack.c.h.b16 %v203
    %v744 = vunpack.c.l.b16 %v204
    %v745 = vunpack.c.h.b16 %v204
    %v746 = vunpack.c.l.b16 %v205
    %v747 = vunpack.c.h.b16 %v205
    %v748 = vunpack.c.l.b16 %v206
    %v749 = vunpack.c.h.b16 %v206
    %v750 = vunpack.c.l.b16 %v207
    %v751 = vunpack.c.h.b16 %v207
    %v752 = vunpack.c.l.b16 %v208
    %v753 = vunpack.c.h.b16 %v208
    %v754 = vunpack.c.l.b16 %v209
    %v755 = vunpack.c.h.b16 %v209
    %v756 = vunpack.c.l.b16 %v210
    %v757 = vunpack.c.h.b16 %v210
    %v758 = vunpack.c.l.b16 %v211
    %v759 = vunpack.c.h.b16 %v211
    %v760 = vunpack.c.l.b16 %v212
    %v761 = vunpack.c.h.b16 %v212
    %v762 = vunpack.c.l.b16 %v213
    %v763 = vunpack.c.h.b16 %v213
    %v764 = vunpack.c.l.b16 %v214
    %v765 = vunpack.c.h.b16 %v214
    %v766 = vunpack.c.l.b16 %v215
    %v767 = vunpack.c.h.b16 %v215
    %v768 = vunpack.c.l.b16 %v216
    %v769 = vunpack.c.h.b16 %v216
    %v770 = vunpack.c.l.b16 %v217
    %v771 = vunpack.c.h.b16 %v217
    %v772 = vunpack.c.l.b16 %v218
    %v773 = vunpack.c.h.b16 %v218
    %v774 = vunpack.c.l.b16 %v219
    %v775 = vunpack.c.h.b16 %v219
    %v776 = vunpack.c.l.b16 %v220
    %v777 = vunpack.c.h.b16 %v220
    %v778 = vunpack.c.l.b16 %v221
    %v779 = vunpack.c.h.b16 %v221
    %v780 = vunpack.c.l.b16 %v222
    %v781 = vunpack.c.h.b16 %v222
    %v782 = vunpack.c.l.b16 %v223
    %v783 = vunpack.c.h.b16 %v223
    %v784 = vunpack.c.l.b16 %v224
    %v785 = vunpack.c.h.b16 %v224
    %v786 = vunpack.c.l.b16 %v225
    %v787 = vunpack.c.h.b16 %v225
    %v788 = vunpack.c.l.b16 %v226
    %v789 = vunpack.c.h.b16 %v226
    %v790 = vunpack.c.l.b16 %v227
    %v791 = vunpack.c.h.b16 %v227
    %v792 = vunpack.c.l.b16 %v228
    %v793 = vunpack.c.h.b16 %v228
    %v794 = vunpack.c.l.b16 %v229
    %v795 = vunpack.c.h.b16 %v229
    %v796 = vunpack.c.l.b16 %v230
    %v797 = vunpack.c.h.b16 %v230
    %v798 = vunpack.c.l.b16 %v231
    %v799 = vunpack.c.h.b16 %v231
    %v800 = vunpack.c.l.b16 %v232
    %v801 = vunpack.c.h.b16 %v232
    %v802 = vunpack.c.l.b16 %v233
    %v803 = vunpack.c.h.b16 %v233
    %v804 = vunpack.c.l.b16 %v234
    %v805 = vunpack.c.h.b16 %v234
    %v806 = vunpack.c.l.b16 %v235
    %v807 = vunpack.c.h.b16 %v235
    %v808 = vunpack.c.l.b16 %v236
    %v809 = vunpack.c.h.b16 %v236
    %v810 = vunpack.c.l.b16 %v237
    %v811 = vunpack.c.h.b16 %v237
    %v812 = vunpack.c.l.b16 %v238
    %v813 = vunpack.c.h.b16 %v238
    %v814 = vunpack.c.l.b16 %v239
    %v815 = vunpack.c.h.b16 %v239
    %v816 = vunpack.c.l.b16 %v240
    %v817 = vunpack.c.h.b16 %v240
    %v818 = vunpack.c.l.b16 %v241
    %v819 = vunpack.c.h.b16 %v241
    %v820 = vunpack.c.l.b16 %v242
    %v821 = vunpack.c.h.b16 %v242
    %v822 = vunpack.c.l.b16 %v243
    %v823 = vunpack.c.h.b16 %v243
    %v824 = vunpack.c.l.b16 %v244
    %v825 = vunpack.c.h.b16 %v244
    %v826 = vunpack.c.l.b16 %v245
    %v827 = vunpack.c.h.b16 %v245
    %v828 = vunpack.c.l.b16 %v246
    %v829 = vunpack.c.h.b16 %v246
    %v830 = vunpack.c.l.b16 %v247
    %v831 = vunpack.c.h.b16 %v247
    %v832 = vunpack.c.l.b16 %v248
    %v833 = vunpack.c.h.b16 %v248
    %v834 = vunpack.c.l.b16 %v249
    %v835 = vunpack.c.h.b16 %v249
    %v836 = vunpack.c.l.b16 %v250
    %v837 = vunpack.c.h.b16 %v250
    %v838 = vunpack.c.l.b16 %v251
    %v839 = vunpack.c.h.b16 %v251
    %v840 = vunpack.c.l.b16 %v252
    %v841 = vunpack.c.h.b16 %v252
    %v842 = vunpack.c.l.b16 %v253
    %v843 = vunpack.c.h.b16 %v253
    %v844 = vunpack.c.l.b16 %v254
    %v845 = vunpack.c.h.b16 %v254
    %v846 = vunpack.c.l.b16 %v255
    %v847 = vunpack.c.h.b16 %v255
    %v848 = vunpack.c.l.b16 %v256
    %v849 = vunpack.c.h.b16 %v256
    %v850 = vunpack.c.l.b16 %v257
    %v851 = vunpack.c.h.b16 %v257
    %v852 = vunpack.c.l.b16 %v258
    %v853 = vunpack.c.h.b16 %v258
    %v854 = vunpack.c.l.b16 %v259
    %v855 = vunpack.c.h.b16 %v259
    %v856 = vunpack.c.l.b16 %v260
    %v857 = vunpack.c.h.b16 %v260
    %v858 = vunpack.c.l.b16 %v261
    %v859 = vunpack.c.h.b16 %v261
    %v860 = vpack.c.b16 %v480, %v476
    %v861 = vpack.c.b16 %v481, %v477
    %v862 = vpack.c.b16 %v482, %v478
    %v863 = vpack.c.b16 %v483, %v479
    %v864 = vpack.c.b16 %v488, %v484
    %v865 = vpack.c.b16 %v489, %v485
    %v866 = vpack.c.b16 %v490, %v486
    %v867 = vpack.c.b16 %v491, %v487
    %v868 = vpack.c.b16 %v496, %v492
    %v869 = vpack.c.b16 %v497, %v493
    %v870 = vpack.c.b16 %v498, %v494
    %v871 = vpack.c.b16 %v499, %v495
    %v872 = vpack.c.b16 %v504, %v500
    %v873 = vpack.c.b16 %v505, %v501
    %v874 = vpack.c.b16 %v506, %v502
    %v875 = vpack.c.b16 %v507, %v503
    %v876 = vpack.c.b16 %v512, %v508
    %v877 = vpack.c.b16 %v513, %v509
    %v878 = vpack.c.b16 %v514, %v510
    %v879 = vpack.c.b16 %v515, %v511
    %v880 = vpack.c.b16 %v520, %v516
    %v881 = vpack.c.b16 %v521, %v517
    %v882 = vpack.c.b16 %v522, %v518
    %v883 = vpack.c.b16 %v523, %v519
    %v884 = vpack.c.b16 %v528, %v524
    %v885 = vpack.c.b16 %v529, %v525
    %v886 = vpack.c.b16 %v530, %v526
    %v887 = vpack.c.b16 %v531, %v527
    %v888 = vpack.c.b16 %v536, %v532
    %v889 = vpack.c.b16 %v537, %v533
    %v890 = vpack.c.b16 %v538, %v534
    %v891 = vpack.c.b16 %v539, %v535
    %v892 = vpack.c.b16 %v544, %v540
    %v893 = vpack.c.b16 %v545, %v541
    %v894 = vpack.c.b16 %v546, %v542
    %v895 = vpack.c.b16 %v547, %v543
    %v896 = vpack.c.b16 %v552, %v548
    %v897 = vpack.c.b16 %v553, %v549
    %v898 = vpack.c.b16 %v554, %v550
    %v899 = vpack.c.b16 %v555, %v551
    %v900 = vpack.c.b16 %v560, %v556
    %v901 = vpack.c.b16 %v561, %v557
    %v902 = vpack.c.b16 %v562, %v558
    %v903 = vpack.c.b16 %v563, %v559
    %v904 = vpack.c.b16 %v568, %v564
    %v905 = vpack.c.b16 %v569, %v565
    %v906 = vpack.c.b16 %v570, %v566
    %v907 = vpack.c.b16 %v571, %v567
    %v908 = vpack.c.b16 %v576, %v572
    %v909 = vpack.c.b16 %v577, %v573
    %v910 = vpack.c.b16 %v578, %v574
    %v911 = vpack.c.b16 %v579, %v575
    %v912 = vpack.c.b16 %v584, %v580
    %v913 = vpack.c.b16 %v585, %v581
    %v914 = vpack.c.b16 %v586, %v582
    %v915 = vpack.c.b16 %v587, %v583
    %v916 = vpack.c.b16 %v592, %v588
    %v917 = vpack.c.b16 %v593, %v589
    %v918 = vpack.c.b16 %v594, %v590
    %v919 = vpack.c.b16 %v595, %v591
    %v920 = vpack.c.b16 %v600, %v596
    %v921 = vpack.c.b16 %v601, %v597
    %v922 = vpack.c.b16 %v602, %v598
    %v923 = vpack.c.b16 %v603, %v599
    %v924 = vpack.c.b16 %v608, %v604
    %v925 = vpack.c.b16 %v609, %v605
    %v926 = vpack.c.b16 %v610, %v606
    %v927 = vpack.c.b16 %v611, %v607
    %v928 = vpack.c.b16 %v616, %v612
    %v929 = vpack.c.b16 %v617, %v613
    %v930 = vpack.c.b16 %v618, %v614
    %v931 = vpack.c.b16 %v619, %v615
    %v932 = vpack.c.b16 %v624, %v620
    %v933 = vpack.c.b16 %v625, %v621
    %v934 = vpack.c.b16 %v626, %v622
    %v935 = vpack.c.b16 %v627, %v623
    %v936 = vpack.c.b16 %v632, %v628
    %v937 = vpack.c.b16 %v633, %v629
    %v938 = vpack.c.b16 %v634, %v630
    %v939 = vpack.c.b16 %v635, %v631
    %v940 = vpack.c.b16 %v640, %v636
    %v941 = vpack.c.b16 %v641, %v637
    %v942 = vpack.c.b16 %v642, %v638
    %v943 = vpack.c.b16 %v643, %v639
    %v944 = vpack.c.b16 %v648, %v644
    %v945 = vpack.c.b16 %v649, %v645
    %v946 = vpack.c.b16 %v650, %v646
    %v947 = vpack.c.b16 %v651, %v647
    %v948 = vpack.c.b16 %v656, %v652
    %v949 = vpack.c.b16 %v657, %v653
    %v950 = vpack.c.b16 %v658, %v654
    %v951 = vpack.c.b16 %v659, %v655
    %v952 = vpack.c.b16 %v664, %v660
    %v953 = vpack.c.b16 %v665, %v661
    %v954 = vpack.c.b16 %v666, %v662
    %v955 = vpack.c.b16 %v667, %v663
    %v956 = vpack.c.b16 %v672, %v668
    %v957 = vpack.c.b16 %v673, %v669
    %v958 = vpack.c.b16 %v674, %v670
    %v959 = vpack.c.b16 %v675, %v671
    %v960 = vpack.c.b16 %v680, %v676
    %v961 = vpack.c.b16 %v681, %v677
    %v962 = vpack.c.b16 %v682, %v678
    %v963 = vpack.c.b16 %v683, %v679
    %v964 = vpack.c.b16 %v688, %v684
    %v965 = vpack.c.b16 %v689, %v685
    %v966 = vpack.c.b16 %v690, %v686
    %v967 = vpack.c.b16 %v691, %v687
    %v968 = vpack.c.b16 %v696, %v692
    %v969 = vpack.c.b16 %v697, %v693
    %v970 = vpack.c.b16 %v698, %v694
    %v971 = vpack.c.b16 %v699, %v695
    %v972 = vpack.c.b16 %v704, %v700
    %v973 = vpack.c.b16 %v705, %v701
    %v974 = vpack.c.b16 %v706, %v702
    %v975 = vpack.c.b16 %v707, %v703
    %v976 = vpack.c.b16 %v712, %v708
    %v977 = vpack.c.b16 %v713, %v709
    %v978 = vpack.c.b16 %v714, %v710
    %v979 = vpack.c.b16 %v715, %v711
    %v980 = vpack.c.b16 %v720, %v716
    %v981 = vpack.c.b16 %v721, %v717
    %v982 = vpack.c.b16 %v722, %v718
    %v983 = vpack.c.b16 %v723, %v719
    %v984 = vpack.c.b16 %v728, %v724
    %v985 = vpack.c.b16 %v729, %v725
    %v986 = vpack.c.b16 %v730, %v726
    %v987 = vpack.c.b16 %v731, %v727
    %v988 = vpack.c.b16 %v736, %v732
    %v989 = vpack.c.b16 %v737, %v733
    %v990 = vpack.c.b16 %v738, %v734
    %v991 = vpack.c.b16 %v739, %v735
    %v992 = vpack.c.b16 %v744, %v740
    %v993 = vpack.c.b16 %v745, %v741
    %v994 = vpack.c.b16 %v746, %v742
    %v995 = vpack.c.b16 %v747, %v743
    %v996 = vpack.c.b16 %v752, %v748
    %v997 = vpack.c.b16 %v753, %v749
    %v998 = vpack.c.b16 %v754, %v750
    %v999 = vpack.c.b16 %v755, %v751
    %v1000 = vpack.c.b16 %v760, %v756
    %v1001 = vpack.c.b16 %v761, %v757
    %v1002 = vpack.c.b16 %v762, %v758
    %v1003 = vpack.c.b16 %v763, %v759
    %v1004 = vpack.c.b16 %v768, %v764
    %v1005 = vpack.c.b16 %v769, %v765
    %v1006 = vpack.c.b16 %v770, %v766
    %v1007 = vpack.c.b16 %v771, %v767
    %v1008 = vpack.c.b16 %v776, %v772
    %v1009 = vpack.c.b16 %v777, %v773
    %v1010 = vpack.c.b16 %v778, %v774
    %v1011 = vpack.c.b16 %v779, %v775
    %v1012 = vpack.c.b16 %v784, %v780
    %v1013 = vpack.c.b16 %v785, %v781
    %v1014 = vpack.c.b16 %v786, %v782
    %v1015 = vpack.c.b16 %v787, %v783
    %v1016 = vpack.c.b16 %v792, %v788
    %v1017 = vpack.c.b16 %v793, %v789
    %v1018 = vpack.c.b16 %v794, %v790
    %v1019 = vpack.c.b16 %v795, %v791
    %v1020 = vpack.c.b16 %v800, %v796
    %v1021 = vpack.c.b16 %v801, %v797
    %v1022 = vpack.c.b16 %v802, %v798
    %v1023 = vpack.c.b16 %v803, %v799
    %v1024 = vpack.c.b16 %v808, %v804
    %v1025 = vpack.c.b16 %v809, %v805
    %v1026 = vpack.c.b16 %v810, %v806
    %v1027 = vpack.c.b16 %v811, %v807
    %v1028 = vpack.c.b16 %v816, %v812
    %v1029 = vpack.c.b16 %v817, %v813
    %v1030 = vpack.c.b16 %v818, %v814
    %v1031 = vpack.c.b16 %v819, %v815
    %v1032 = vpack.c.b16 %v824, %v820
    %v1033 = vpack.c.b16 %v825, %v821
    %v1034 = vpack.c.b16 %v826, %v822
    %v1035 = vpack.c.b16 %v827, %v823
    %v1036 = vpack.c.b16 %v832, %v828
    %v1037 = vpack.c.b16 %v833, %v829
    %v1038 = vpack.c.b16 %v834, %v830
    %v1039 = vpack.c.b16 %v835, %v831
    %v1040 = vpack.c.b16 %v840, %v836
    %v1041 = vpack.c.b16 %v841, %v837
    %v1042 = vpack.c.b16 %v842, %v838
    %v1043 = vpack.c.b16 %v843, %v839
    %v1044 = vpack.c.b16 %v848, %v844
    %v1045 = vpack.c.b16 %v849, %v845
    %v1046 = vpack.c.b16 %v850, %v846
    %v1047 = vpack.c.b16 %v851, %v847
    %v1048 = vpack.c.b16 %v856, %v852
    %v1049 = vpack.c.b16 %v857, %v853
    %v1050 = vpack.c.b16 %v858, %v854
    %v1051 = vpack.c.b16 %v859, %v855
    %1244 = vmatprep.subr.bf16.mxu0 %v889
    %1245 = vmatpush1.bf16.msra.mxu0 %v888
    %1246 = vmatprep.subr.bf16.mxu0 %v885
    %1247 = vmatpush1.bf16.msra.mxu0 %v884
    %1248 = vmatprep.subr.bf16.mxu0 %v881
    %1249 = vmatpush1.bf16.msra.mxu0 %v880
    %1250 = vmatprep.subr.bf16.mxu0 %v877
    %1251 = vmatpush1.bf16.msra.mxu0 %v876
    %1252 = vmatprep.subr.bf16.mxu0 %v873
    %1253 = vmatpush1.bf16.msra.mxu0 %v872
    %1254 = vmatprep.subr.bf16.mxu0 %v869
    %1255 = vmatpush1.bf16.msra.mxu0 %v868
    %1256 = vmatprep.subr.bf16.mxu0 %v865
    %1257 = vmatpush1.bf16.msra.mxu0 %v864
    %1258 = vmatprep.subr.bf16.mxu0 %v861
    %1259 = vmatpush1.bf16.msra.mxu0 %v860
    %1260 = vmatprep.subr.bf16.mxu0 %v921
    %1261 = vmatpush2.bf16.msra.mxu0 %v920
    %1262 = vmatprep.subr.bf16.mxu0 %v917
    %1263 = vmatpush2.bf16.msra.mxu0 %v916
    %1264 = vmatprep.subr.bf16.mxu0 %v913
    %1265 = vmatpush2.bf16.msra.mxu0 %v912
    %1266 = vmatprep.subr.bf16.mxu0 %v909
    %1267 = vmatpush2.bf16.msra.mxu0 %v908
    %1268 = vmatprep.subr.bf16.mxu0 %v905
    %1269 = vmatpush2.bf16.msra.mxu0 %v904
    %1270 = vmatprep.subr.bf16.mxu0 %v901
    %1271 = vmatpush2.bf16.msra.mxu0 %v900
    %1272 = vmatprep.subr.bf16.mxu0 %v897
    %1273 = vmatpush2.bf16.msra.mxu0 %v896
    %1274 = vmatprep.subr.bf16.mxu0 %v893
    %1275 = vmatpush2.bf16.msra.mxu0 %v892
    %1276 = vmatprep.mubr.bf16.mxu0 %v65
    %1277 = vmatmul.mubr.bf16.gmra.mxu0 %v64
    %v1278 = vpop.f32.mrf.mxu0
    %v1279 = vadd.f32 %v267, %v1278
    %v1280 = vpop.f32.mrf.mxu0
    %v1281 = vadd.f32 %v271, %v1280
    %v1282 = vpop.f32.mrf.mxu0
    %v1283 = vpop.f32.mrf.mxu0
    %1284 = vdwg.mxu0
    %1285 = vmatprep.subr.bf16.mxu0 %v953
    %1286 = vmatpush1.bf16.msra.mxu0 %v952
    %1287 = vmatprep.subr.bf16.mxu0 %v949
    %1288 = vmatpush1.bf16.msra.mxu0 %v948
    %1289 = vmatprep.subr.bf16.mxu0 %v945
    %1290 = vmatpush1.bf16.msra.mxu0 %v944
    %1291 = vmatprep.subr.bf16.mxu0 %v941
    %1292 = vmatpush1.bf16.msra.mxu0 %v940
    %1293 = vmatprep.subr.bf16.mxu0 %v937
    %1294 = vmatpush1.bf16.msra.mxu0 %v936
    %1295 = vmatprep.subr.bf16.mxu0 %v933
    %1296 = vmatpush1.bf16.msra.mxu0 %v932
    %1297 = vmatprep.subr.bf16.mxu0 %v929
    %1298 = vmatpush1.bf16.msra.mxu0 %v928
    %1299 = vmatprep.subr.bf16.mxu0 %v925
    %1300 = vmatpush1.bf16.msra.mxu0 %v924
    %1301 = vmatprep.subr.bf16.mxu0 %v985
    %1302 = vmatpush2.bf16.msra.mxu0 %v984
    %1303 = vmatprep.subr.bf16.mxu0 %v981
    %1304 = vmatpush2.bf16.msra.mxu0 %v980
    %1305 = vmatprep.subr.bf16.mxu0 %v977
    %1306 = vmatpush2.bf16.msra.mxu0 %v976
    %1307 = vmatprep.subr.bf16.mxu0 %v973
    %1308 = vmatpush2.bf16.msra.mxu0 %v972
    %1309 = vmatprep.subr.bf16.mxu0 %v969
    %1310 = vmatpush2.bf16.msra.mxu0 %v968
    %1311 = vmatprep.subr.bf16.mxu0 %v965
    %1312 = vmatpush2.bf16.msra.mxu0 %v964
    %1313 = vmatprep.subr.bf16.mxu0 %v961
    %1314 = vmatpush2.bf16.msra.mxu0 %v960
    %1315 = vmatprep.subr.bf16.mxu0 %v957
    %1316 = vmatpush2.bf16.msra.mxu0 %v956
    %1317 = vmatprep.mubr.bf16.mxu0 %v67
    %1318 = vmatmul.mubr.bf16.gmra.mxu0 %v66
    %v1319 = vpop.f32.mrf.mxu0
    %v1320 = vadd.f32 %v1279, %v1319
    %v1321 = vpop.f32.mrf.mxu0
    %v1322 = vadd.f32 %v1281, %v1321
    %v1323 = vpop.f32.mrf.mxu0
    %v1324 = vpop.f32.mrf.mxu0
    %1325 = vdwg.mxu0
    %1326 = vmatprep.subr.bf16.mxu0 %v1017
    %1327 = vmatpush1.bf16.msra.mxu0 %v1016
    %1328 = vmatprep.subr.bf16.mxu0 %v1013
    %1329 = vmatpush1.bf16.msra.mxu0 %v1012
    %1330 = vmatprep.subr.bf16.mxu0 %v1009
    %1331 = vmatpush1.bf16.msra.mxu0 %v1008
    %1332 = vmatprep.subr.bf16.mxu0 %v1005
    %1333 = vmatpush1.bf16.msra.mxu0 %v1004
    %1334 = vmatprep.subr.bf16.mxu0 %v1001
    %1335 = vmatpush1.bf16.msra.mxu0 %v1000
    %1336 = vmatprep.subr.bf16.mxu0 %v997
    %1337 = vmatpush1.bf16.msra.mxu0 %v996
    %1338 = vmatprep.subr.bf16.mxu0 %v993
    %1339 = vmatpush1.bf16.msra.mxu0 %v992
    %1340 = vmatprep.subr.bf16.mxu0 %v989
    %1341 = vmatpush1.bf16.msra.mxu0 %v988
    %1342 = vmatprep.subr.bf16.mxu0 %v1049
    %1343 = vmatpush2.bf16.msra.mxu0 %v1048
    %1344 = vmatprep.subr.bf16.mxu0 %v1045
    %1345 = vmatpush2.bf16.msra.mxu0 %v1044
    %1346 = vmatprep.subr.bf16.mxu0 %v1041
    %1347 = vmatpush2.bf16.msra.mxu0 %v1040
    %1348 = vmatprep.subr.bf16.mxu0 %v1037
    %1349 = vmatpush2.bf16.msra.mxu0 %v1036
    %1350 = vmatprep.subr.bf16.mxu0 %v1033
    %1351 = vmatpush2.bf16.msra.mxu0 %v1032
    %1352 = vmatprep.subr.bf16.mxu0 %v1029
    %1353 = vmatpush2.bf16.msra.mxu0 %v1028
    %1354 = vmatprep.subr.bf16.mxu0 %v1025
    %1355 = vmatpush2.bf16.msra.mxu0 %v1024
    %1356 = vmatprep.subr.bf16.mxu0 %v1021
    %1357 = vmatpush2.bf16.msra.mxu0 %v1020
    %1358 = vmatprep.mubr.bf16.mxu0 %v69
    %1359 = vmatmul.mubr.bf16.gmra.mxu0 %v68
    %v1360 = vpop.f32.mrf.mxu0
    %v1361 = vadd.f32 %v1320, %v1360
    %v1362 = vpop.f32.mrf.mxu0
    %v1363 = vadd.f32 %v1322, %v1362
    %v1364 = vpop.f32.mrf.mxu0
    %v1365 = vpop.f32.mrf.mxu0
    %1366 = vdwg.mxu0
    %1367 = vmatprep.subr.bf16.mxu0 %v891
    %1368 = vmatpush1.bf16.msra.mxu0 %v890
    %1369 = vmatprep.subr.bf16.mxu0 %v887
    %1370 = vmatpush1.bf16.msra.mxu0 %v886
    %1371 = vmatprep.subr.bf16.mxu0 %v883
    %1372 = vmatpush1.bf16.msra.mxu0 %v882
    %1373 = vmatprep.subr.bf16.mxu0 %v879
    %1374 = vmatpush1.bf16.msra.mxu0 %v878
    %1375 = vmatprep.subr.bf16.mxu0 %v875
    %1376 = vmatpush1.bf16.msra.mxu0 %v874
    %1377 = vmatprep.subr.bf16.mxu0 %v871
    %1378 = vmatpush1.bf16.msra.mxu0 %v870
    %1379 = vmatprep.subr.bf16.mxu0 %v867
    %1380 = vmatpush1.bf16.msra.mxu0 %v866
    %1381 = vmatprep.subr.bf16.mxu0 %v863
    %1382 = vmatpush1.bf16.msra.mxu0 %v862
    %1383 = vmatprep.subr.bf16.mxu0 %v923
    %1384 = vmatpush2.bf16.msra.mxu0 %v922
    %1385 = vmatprep.subr.bf16.mxu0 %v919
    %1386 = vmatpush2.bf16.msra.mxu0 %v918
    %1387 = vmatprep.subr.bf16.mxu0 %v915
    %1388 = vmatpush2.bf16.msra.mxu0 %v914
    %1389 = vmatprep.subr.bf16.mxu0 %v911
    %1390 = vmatpush2.bf16.msra.mxu0 %v910
    %1391 = vmatprep.subr.bf16.mxu0 %v907
    %1392 = vmatpush2.bf16.msra.mxu0 %v906
    %1393 = vmatprep.subr.bf16.mxu0 %v903
    %1394 = vmatpush2.bf16.msra.mxu0 %v902
    %1395 = vmatprep.subr.bf16.mxu0 %v899
    %1396 = vmatpush2.bf16.msra.mxu0 %v898
    %1397 = vmatprep.subr.bf16.mxu0 %v895
    %1398 = vmatpush2.bf16.msra.mxu0 %v894
    %1399 = vmatprep.mubr.bf16.mxu0 %v65
    %1400 = vmatmul.mubr.bf16.gmra.mxu0 %v64
    %v1401 = vpop.f32.mrf.mxu0
    %v1402 = vadd.f32 %v275, %v1401
    %v1403 = vpop.f32.mrf.mxu0
    %v1404 = vadd.f32 %v279, %v1403
    %v1405 = vpop.f32.mrf.mxu0
    %v1406 = vpop.f32.mrf.mxu0
    %1407 = vdwg.mxu0
    %1408 = vmatprep.subr.bf16.mxu0 %v955
    %1409 = vmatpush1.bf16.msra.mxu0 %v954
    %1410 = vmatprep.subr.bf16.mxu0 %v951
    %1411 = vmatpush1.bf16.msra.mxu0 %v950
    %1412 = vmatprep.subr.bf16.mxu0 %v947
    %1413 = vmatpush1.bf16.msra.mxu0 %v946
    %1414 = vmatprep.subr.bf16.mxu0 %v943
    %1415 = vmatpush1.bf16.msra.mxu0 %v942
    %1416 = vmatprep.subr.bf16.mxu0 %v939
    %1417 = vmatpush1.bf16.msra.mxu0 %v938
    %1418 = vmatprep.subr.bf16.mxu0 %v935
    %1419 = vmatpush1.bf16.msra.mxu0 %v934
    %1420 = vmatprep.subr.bf16.mxu0 %v931
    %1421 = vmatpush1.bf16.msra.mxu0 %v930
    %1422 = vmatprep.subr.bf16.mxu0 %v927
    %1423 = vmatpush1.bf16.msra.mxu0 %v926
    %1424 = vmatprep.subr.bf16.mxu0 %v987
    %1425 = vmatpush2.bf16.msra.mxu0 %v986
    %1426 = vmatprep.subr.bf16.mxu0 %v983
    %1427 = vmatpush2.bf16.msra.mxu0 %v982
    %1428 = vmatprep.subr.bf16.mxu0 %v979
    %1429 = vmatpush2.bf16.msra.mxu0 %v978
    %1430 = vmatprep.subr.bf16.mxu0 %v975
    %1431 = vmatpush2.bf16.msra.mxu0 %v974
    %1432 = vmatprep.subr.bf16.mxu0 %v971
    %1433 = vmatpush2.bf16.msra.mxu0 %v970
    %1434 = vmatprep.subr.bf16.mxu0 %v967
    %1435 = vmatpush2.bf16.msra.mxu0 %v966
    %1436 = vmatprep.subr.bf16.mxu0 %v963
    %1437 = vmatpush2.bf16.msra.mxu0 %v962
    %1438 = vmatprep.subr.bf16.mxu0 %v959
    %1439 = vmatpush2.bf16.msra.mxu0 %v958
    %1440 = vmatprep.mubr.bf16.mxu0 %v67
    %1441 = vmatmul.mubr.bf16.gmra.mxu0 %v66
    %v1442 = vpop.f32.mrf.mxu0
    %v1443 = vadd.f32 %v1402, %v1442
    %v1444 = vpop.f32.mrf.mxu0
    %v1445 = vadd.f32 %v1404, %v1444
    %v1446 = vpop.f32.mrf.mxu0
    %v1447 = vpop.f32.mrf.mxu0
    %1448 = vdwg.mxu0
    %1449 = vmatprep.subr.bf16.mxu0 %v1019
    %1450 = vmatpush1.bf16.msra.mxu0 %v1018
    %1451 = vmatprep.subr.bf16.mxu0 %v1015
    %1452 = vmatpush1.bf16.msra.mxu0 %v1014
    %1453 = vmatprep.subr.bf16.mxu0 %v1011
    %1454 = vmatpush1.bf16.msra.mxu0 %v1010
    %1455 = vmatprep.subr.bf16.mxu0 %v1007
    %1456 = vmatpush1.bf16.msra.mxu0 %v1006
    %1457 = vmatprep.subr.bf16.mxu0 %v1003
    %1458 = vmatpush1.bf16.msra.mxu0 %v1002
    %1459 = vmatprep.subr.bf16.mxu0 %v999
    %1460 = vmatpush1.bf16.msra.mxu0 %v998
    %1461 = vmatprep.subr.bf16.mxu0 %v995
    %1462 = vmatpush1.bf16.msra.mxu0 %v994
    %1463 = vmatprep.subr.bf16.mxu0 %v991
    %1464 = vmatpush1.bf16.msra.mxu0 %v990
    %1465 = vmatprep.subr.bf16.mxu0 %v1051
    %1466 = vmatpush2.bf16.msra.mxu0 %v1050
    %1467 = vmatprep.subr.bf16.mxu0 %v1047
    %1468 = vmatpush2.bf16.msra.mxu0 %v1046
    %1469 = vmatprep.subr.bf16.mxu0 %v1043
    %1470 = vmatpush2.bf16.msra.mxu0 %v1042
    %1471 = vmatprep.subr.bf16.mxu0 %v1039
    %1472 = vmatpush2.bf16.msra.mxu0 %v1038
    %1473 = vmatprep.subr.bf16.mxu0 %v1035
    %1474 = vmatpush2.bf16.msra.mxu0 %v1034
    %1475 = vmatprep.subr.bf16.mxu0 %v1031
    %1476 = vmatpush2.bf16.msra.mxu0 %v1030
    %1477 = vmatprep.subr.bf16.mxu0 %v1027
    %1478 = vmatpush2.bf16.msra.mxu0 %v1026
    %1479 = vmatprep.subr.bf16.mxu0 %v1023
    %1480 = vmatpush2.bf16.msra.mxu0 %v1022
    %1481 = vmatprep.mubr.bf16.mxu0 %v69
    %1482 = vmatmul.mubr.bf16.gmra.mxu0 %v68
    %v1483 = vpop.f32.mrf.mxu0
    %v1484 = vadd.f32 %v1443, %v1483
    %v1485 = vpop.f32.mrf.mxu0
    %v1486 = vadd.f32 %v1445, %v1485
    %v1487 = vpop.f32.mrf.mxu0
    %v1488 = vpop.f32.mrf.mxu0
    %1489 = vdwg.mxu0
    %v1490 = vmax.f32 %v1361, 0.0
    %v1491 = vmax.f32 %v1363, 0.0
    %v1492 = vmax.f32 %v1484, 0.0
    %v1493 = vmax.f32 %v1486, 0.0
    %v1494 = vld [vmem:[#allocation7] sm:$0xf]
    %v1496 = vlaneseq
    %v1497 = vshrl.u32 %v1496, 7
    %v1498 = vsub.s32 0, %v1497
    %v1499 = vrot.slane %v1494, %v1498
    %v1500 = vlaneseq
    %v1501 = vshrl.u32 %v1500, 7
    %v1502 = vsub.s32 1, %v1501
    %v1503 = vrot.slane %v1494, %v1502
    %v1504 = vlaneseq
    %v1505 = vshrl.u32 %v1504, 7
    %v1506 = vsub.s32 2, %v1505
    %v1507 = vrot.slane %v1494, %v1506
    %v1508 = vlaneseq
    %v1509 = vshrl.u32 %v1508, 7
    %v1510 = vsub.s32 3, %v1509
    %v1511 = vrot.slane %v1494, %v1510
    %v1516 = vmul.f32 %v1490, %v1499
    %v1517 = vmul.f32 %v1491, %v1503
    %v1518 = vmul.f32 %v1492, %v1507
    %v1519 = vmul.f32 %v1493, %v1511
    %v1520 = vadd.f32 %v1516, %v1517
    %v1521 = vadd.f32 %v1520, %v1518
    %v1522 = vadd.f32 %v1521, %v1519
    %1523 = vadd.xlane.f32.xlu0 %v1522
    %v1524 = vpop.xlane.xlu0 %1523
    %s1525 = sld [smem:[#allocation2]]
    %v1526 = vstv %s1525
    %v1527 = vadd.f32 %v1524, %v1526
    %vm1528 = vcmask 7168
    %1529 = vst.msk [vmem:[%s5] sm:$0xff] %vm1528, %v1527
    // Predicated region
    $region34: #{tpu_custom_call.1} parent=1 // pred_check
      _
    $region35: #{tpu_custom_call.1} parent=1 // pred_check_branch
      %1531 = sbr.rel (0) target = $region37
    $region36: #{tpu_custom_call.1} parent=1 // pred_region
      _
    $region37: #{tpu_custom_call.1} parent=1 // pred_fallthru
      _
    // Predicated region
    $region38: #{tpu_custom_call.1} parent=1 // pred_check
      _
    $region39: #{tpu_custom_call.1} parent=1 // pred_check_branch
      %1533 = sbr.rel (0) target = $region41
    $region40: #{tpu_custom_call.1} parent=1 // pred_region
      _
    $region41: #{tpu_custom_call.1} parent=1 // pred_fallthru
      _
    %1534 = vsyncpa [#allocation4], 1
    %1535 = vsyncpa [#allocation6], 1

</llo_original>
